<compile_context>
chip_gen: v7x
topology: tpu7x:2x2x1
jax: 0.10.0
libtpu: 0.0.40
codegen_flags: <defaults>
</compile_context>

<pallas_src>
import functools

import numpy as np
import jax
import jax.numpy as jnp
from jax.experimental import pallas as pl
from jax.experimental.pallas import tpu as pltpu


def joint_cat_pose_kernel(xf_ref, wft_ref, wh_ref, bias_ref, out_ref, *, nc, nd, n0):
    lwidth = wh_ref.shape[1]
    bias = bias_ref[...]                                         # (2, L) f32

    # ---- feature_model: flatten -> Linear -> ReLU ----
    # Wf is pre-transposed (N0, in_dim): NT dot contracts the dense lane dim.
    feat = jax.lax.dot_general(
        xf_ref[...], wft_ref[...],
        dimension_numbers=(((1,), (1,)), ((), ())),
        preferred_element_type=jnp.float32)                      # (Bp, N0) f32
    feat = jnp.maximum(feat + bias[0:1, :n0], 0.0)

    # ---- fused heads: lanes [0:nc)=fc logits y0, [nc:nc+nc*nd)=all pose models ----
    heads = jnp.dot(feat.astype(jnp.bfloat16), wh_ref[...],
                    preferred_element_type=jnp.float32) + bias[1:2, :lwidth]

    bp = heads.shape[0]
    lane = jax.lax.broadcasted_iota(jnp.int32, (bp, lwidth), 1)
    is_y0 = lane < nc

    # ---- label = one_hot(argmax(y0)) with first-occurrence tie-break ----
    # (NaN logits would give idx=lwidth -> y1=0 instead of NaN; reference propagates NaN.)
    y0_only = jnp.where(is_y0, heads, -jnp.inf)
    row_max = jnp.max(y0_only, axis=1, keepdims=True)
    idx = jnp.min(jnp.where(is_y0 & (heads == row_max), lane, lwidth),
                  axis=1, keepdims=True)                         # (Bp, 1)

    # ---- keep only pose_models[idx]: its nd lanes are [nc+idx*nd, nc+idx*nd+nd) ----
    lo = nc + idx * nd
    selected = jnp.where((lane >= lo) & (lane < lo + nd), heads, 0.0)

    # ---- 0/1 gather matrix built in-kernel (no HBM constant / extra DMA):
    #      source lane r = nc + class*nd + d  ->  dest lane c = nc + d
    r = jax.lax.broadcasted_iota(jnp.int32, (lwidth, lwidth), 0)
    c = jax.lax.broadcasted_iota(jnp.int32, (lwidth, lwidth), 1)
    gather = ((r >= nc) & (r < nc + nc * nd)
              & (c >= nc) & (c < nc + nd)
              & ((r - nc) % nd == (c - nc))).astype(jnp.float32)
    # Keep this matmul f32: gather is exact 0/1 with exactly one source lane per dest
    # lane, so it is bit-exact w.r.t. the reference einsum.
    y1_full = jnp.dot(selected, gather, preferred_element_type=jnp.float32)

    # ---- packed output: lanes [0:nc)=y0, [nc:nc+nd)=pi*tanh(y1), rest 0 ----
    out_ref[...] = jnp.where(is_y0, heads, jnp.float32(np.pi) * jnp.tanh(y1_full))


def pack_params(params, lane_width=128):
    """One-time packing of the module weights (hoisted out of the per-call path)."""
    Wf, bf, Wfc, bfc, Wpose, bpose = params
    in_dim, N0 = Wf.shape
    NC = Wfc.shape[1]
    ND = Wpose.shape[1] // NC
    L = lane_width
    assert NC * (1 + ND) <= L, "fused heads must fit one lane group"
    assert N0 <= L, "feature bias row packing assumes N0 <= 128"

    # Wf pre-transposed -> (N0, in_dim) bf16: lane dim is the dense in_dim.
    wft = jnp.asarray(Wf).T.astype(jnp.bfloat16)

    # Fused + lane-padded head weights: cols [0:NC)=fc, [NC:NC+NC*ND)=all pose models.
    wh = jnp.zeros((N0, L), jnp.float32)
    wh = wh.at[:, :NC].set(Wfc).at[:, NC:NC + NC * ND].set(Wpose).astype(jnp.bfloat16)

    # Merged bias block: row 0 = feature bias bf (lanes [0:N0)), row 1 = fused head bias.
    bias = jnp.zeros((2, L), jnp.float32)
    bias = (bias.at[0, :N0].set(bf[0])
                .at[1, :NC].set(bfc[0])
                .at[1, NC:NC + NC * ND].set(bpose[0]))

    return jax.block_until_ready((wft, wh, bias))


def joint_cat_pose_forward(x, wft, wh, bias, *, nc, nd):
    """x: (B, C, H, W) float32.  Returns [y0 (B, nc), y1 (B, nd)]."""
    B = x.shape[0]
    xf = x.reshape(B, -1)                       # same as torch .view(B, -1)
    in_dim = xf.shape[1]
    n0 = wft.shape[0]
    L = wh.shape[1]

    Bp = max(16, ((B + 15) // 16) * 16)         # full bf16 vreg sublane occupancy
    xf_pad = jnp.zeros((Bp, in_dim), jnp.float32).at[:B].set(xf).astype(jnp.bfloat16)

    vmem = pl.BlockSpec(memory_space=pltpu.MemorySpace.VMEM)
    out = pl.pallas_call(
        functools.partial(joint_cat_pose_kernel, nc=nc, nd=nd, n0=n0),
        out_shape=jax.ShapeDtypeStruct((Bp, L), jnp.float32),
        in_specs=[vmem, vmem, vmem, vmem],
        out_specs=vmem,
    )(xf_pad, wft, wh, bias)

    return [out[:B, :nc], out[:B, nc:nc + nd]]


def make_params(key, in_dim, n0, num_classes, ndim):
    ks = jax.random.split(key, 6)
    Wf = 0.02 * jax.random.normal(ks[0], (in_dim, n0), jnp.float32)
    bf = 0.01 * jax.random.normal(ks[1], (1, n0), jnp.float32)
    Wfc = 0.1 * jax.random.normal(ks[2], (n0, num_classes), jnp.float32)
    bfc = 0.01 * jax.random.normal(ks[3], (1, num_classes), jnp.float32)
    # pose model i occupies columns [i*ndim:(i+1)*ndim]
    Wpose = 0.1 * jax.random.normal(ks[4], (n0, num_classes * ndim), jnp.float32)
    bpose = 0.01 * jax.random.normal(ks[5], (1, num_classes * ndim), jnp.float32)
    return (Wf, bf, Wfc, bfc, Wpose, bpose)


def reference_forward(x, params):
    """Pure-JAX reference mirroring the PyTorch forward (same bf16 operand cast)."""
    (Wf, bf, Wfc, bfc, Wpose, bpose) = params
    B = x.shape[0]
    NC = Wfc.shape[1]
    ND = Wpose.shape[1] // NC
    xf = x.reshape(B, -1).astype(jnp.bfloat16)
    feat = jnp.maximum(
        jnp.dot(xf, Wf.astype(jnp.bfloat16), preferred_element_type=jnp.float32) + bf,
        0.0)
    fb = feat.astype(jnp.bfloat16)
    y0 = jnp.dot(fb, Wfc.astype(jnp.bfloat16),
                 preferred_element_type=jnp.float32) + bfc
    pose = (jnp.dot(fb, Wpose.astype(jnp.bfloat16),
                    preferred_element_type=jnp.float32) + bpose).reshape(B, NC, ND)
    label = jax.nn.one_hot(jnp.argmax(y0, axis=1), NC, dtype=jnp.float32)
    y1 = jnp.einsum('bc,bcd->bd', label, pose)
    return y0, jnp.float32(np.pi) * jnp.tanh(y1)


if __name__ == "__main__":
    B, C, H, W = 2, 4, 16, 16       # input image-like tensor (NCHW)
    N0 = 32                         # feature dim produced by feature_model
    NUM_CLASSES = 10
    NDIM = 3                        # pose output dim per class

    key = jax.random.PRNGKey(0)
    kx, kp = jax.random.split(key)
    x = jax.random.normal(kx, (B, C, H, W), jnp.float32)
    params = make_params(kp, C * H * W, N0, NUM_CLASSES, NDIM)

    # One-time packing + jitted forward (per-call path: xf pad/cast + one pallas_call).
    wft, wh, bias = pack_params(params)
    fwd = jax.jit(functools.partial(joint_cat_pose_forward, nc=NUM_CLASSES, nd=NDIM))

    y0, y1 = fwd(x, wft, wh, bias)
    jax.block_until_ready((y0, y1))

    # sanity check against pure-JAX reference (same bf16 operand numerics)
    r0, r1 = reference_forward(x, params)
    np.testing.assert_allclose(np.asarray(y0), np.asarray(r0), rtol=1e-4, atol=1e-4)
    np.testing.assert_allclose(np.asarray(y1), np.asarray(r1), rtol=1e-4, atol=1e-4)

    print("KERNEL_OK")
</pallas_src>

<mosaic_0001>
module attributes {stable_mosaic.version = 11 : i64} {
  func.func @joint_cat_pose_kernel(%arg0: memref<16x1024xbf16, #tpu.memory_space<vmem>>, %arg1: memref<32x1024xbf16, #tpu.memory_space<vmem>>, %arg2: memref<32x128xbf16, #tpu.memory_space<vmem>>, %arg3: memref<2x128xf32, #tpu.memory_space<vmem>>, %arg4: memref<16x128xf32, #tpu.memory_space<vmem>>) attributes {dimension_semantics = [], scalar_prefetch = 0 : i64, scratch_operands = 0 : i64, tpu.core_type = #tpu.core_type<tc>} {
    %c0 = arith.constant 0 : index
    %c0_0 = arith.constant 0 : index
    %0 = vector.load %arg3[%c0, %c0_0] : memref<2x128xf32, #tpu.memory_space<vmem>>, vector<2x128xf32>
    %c0_1 = arith.constant 0 : index
    %c0_2 = arith.constant 0 : index
    %1 = vector.load %arg0[%c0_1, %c0_2] : memref<16x1024xbf16, #tpu.memory_space<vmem>>, vector<16x1024xbf16>
    %c0_3 = arith.constant 0 : index
    %c0_4 = arith.constant 0 : index
    %2 = vector.load %arg1[%c0_3, %c0_4] : memref<32x1024xbf16, #tpu.memory_space<vmem>>, vector<32x1024xbf16>
    %cst = arith.constant dense<0.000000e+00> : vector<16x32xf32>
    %3 = tpu.matmul %1, %2, %cst {dimension_numbers = #tpu.dot_dimension_numbers<[1], [1], [0], [0], [0, 0, 1, 0], [], []>} : vector<16x1024xbf16>, vector<32x1024xbf16>, vector<16x32xf32> -> vector<16x32xf32>
    %4 = vector.extract_strided_slice %0 {offsets = [0, 0], sizes = [1, 32], strides = [1, 1]} : vector<2x128xf32> to vector<1x32xf32>
    %5 = vector.broadcast %4 : vector<1x32xf32> to vector<16x32xf32>
    %6 = arith.addf %3, %5 : vector<16x32xf32>
    %cst_5 = arith.constant 0.000000e+00 : f32
    %7 = vector.broadcast %cst_5 : f32 to vector<16x32xf32>
    %8 = arith.maximumf %6, %7 : vector<16x32xf32>
    %9 = arith.truncf %8 : vector<16x32xf32> to vector<16x32xbf16>
    %c0_6 = arith.constant 0 : index
    %c0_7 = arith.constant 0 : index
    %10 = vector.load %arg2[%c0_6, %c0_7] : memref<32x128xbf16, #tpu.memory_space<vmem>>, vector<32x128xbf16>
    %cst_8 = arith.constant dense<0.000000e+00> : vector<16x128xf32>
    %11 = tpu.matmul %9, %10, %cst_8 {dimension_numbers = #tpu.dot_dimension_numbers<[1], [0], [0], [1], [0, 0, 1, 1], [], []>} : vector<16x32xbf16>, vector<32x128xbf16>, vector<16x128xf32> -> vector<16x128xf32>
    %12 = vector.extract_strided_slice %0 {offsets = [1, 0], sizes = [1, 128], strides = [1, 1]} : vector<2x128xf32> to vector<1x128xf32>
    %13 = vector.broadcast %12 : vector<1x128xf32> to vector<16x128xf32>
    %14 = arith.addf %11, %13 : vector<16x128xf32>
    %15 = tpu.iota {dimensions = array<i32: 1>} : vector<16x128xi32>
    %c10_i32 = arith.constant 10 : i32
    %16 = vector.broadcast %c10_i32 : i32 to vector<16x128xi32>
    %17 = arith.cmpi slt, %15, %16 : vector<16x128xi32>
    %cst_9 = arith.constant 0xFF800000 : f32
    %18 = vector.broadcast %cst_9 : f32 to vector<16x128xf32>
    %19 = arith.select %17, %14, %18 : vector<16x128xi1>, vector<16x128xf32>
    %cst_10 = arith.constant dense<0xFF800000> : vector<16xf32>
    %20 = vector.multi_reduction <maximumf>, %19, %cst_10 [1] : vector<16x128xf32> to vector<16xf32>
    %21 = vector.shape_cast %20 : vector<16xf32> to vector<16x1xf32>
    %22 = vector.broadcast %21 : vector<16x1xf32> to vector<16x128xf32>
    %23 = arith.cmpf oeq, %14, %22 : vector<16x128xf32>
    %24 = arith.andi %17, %23 : vector<16x128xi1>
    %c128_i32 = arith.constant 128 : i32
    %25 = vector.broadcast %c128_i32 : i32 to vector<16x128xi32>
    %26 = arith.select %24, %15, %25 : vector<16x128xi1>, vector<16x128xi32>
    %cst_11 = arith.constant dense<2147483647> : vector<16xi32>
    %27 = vector.multi_reduction <minsi>, %26, %cst_11 [1] : vector<16x128xi32> to vector<16xi32>
    %28 = vector.shape_cast %27 : vector<16xi32> to vector<16x1xi32>
    %c3_i32 = arith.constant 3 : i32
    %29 = vector.broadcast %c3_i32 : i32 to vector<16x1xi32>
    %30 = arith.muli %28, %29 : vector<16x1xi32>
    %c10_i32_12 = arith.constant 10 : i32
    %31 = vector.broadcast %c10_i32_12 : i32 to vector<16x1xi32>
    %32 = arith.addi %31, %30 : vector<16x1xi32>
    %33 = vector.broadcast %32 : vector<16x1xi32> to vector<16x128xi32>
    %34 = arith.cmpi sge, %15, %33 : vector<16x128xi32>
    %c3_i32_13 = arith.constant 3 : i32
    %35 = vector.broadcast %c3_i32_13 : i32 to vector<16x1xi32>
    %36 = arith.addi %32, %35 : vector<16x1xi32>
    %37 = vector.broadcast %36 : vector<16x1xi32> to vector<16x128xi32>
    %38 = arith.cmpi slt, %15, %37 : vector<16x128xi32>
    %39 = arith.andi %34, %38 : vector<16x128xi1>
    %cst_14 = arith.constant 0.000000e+00 : f32
    %40 = vector.broadcast %cst_14 : f32 to vector<16x128xf32>
    %41 = arith.select %39, %14, %40 : vector<16x128xi1>, vector<16x128xf32>
    %42 = tpu.iota {dimensions = array<i32: 0>} : vector<128x128xi32>
    %43 = tpu.iota {dimensions = array<i32: 1>} : vector<128x128xi32>
    %c10_i32_15 = arith.constant 10 : i32
    %44 = vector.broadcast %c10_i32_15 : i32 to vector<128x128xi32>
    %45 = arith.cmpi sge, %42, %44 : vector<128x128xi32>
    %c40_i32 = arith.constant 40 : i32
    %46 = vector.broadcast %c40_i32 : i32 to vector<128x128xi32>
    %47 = arith.cmpi slt, %42, %46 : vector<128x128xi32>
    %48 = arith.andi %45, %47 : vector<128x128xi1>
    %c10_i32_16 = arith.constant 10 : i32
    %49 = vector.broadcast %c10_i32_16 : i32 to vector<128x128xi32>
    %50 = arith.cmpi sge, %43, %49 : vector<128x128xi32>
    %51 = arith.andi %48, %50 : vector<128x128xi1>
    %c13_i32 = arith.constant 13 : i32
    %52 = vector.broadcast %c13_i32 : i32 to vector<128x128xi32>
    %53 = arith.cmpi slt, %43, %52 : vector<128x128xi32>
    %54 = arith.andi %51, %53 : vector<128x128xi1>
    %c10_i32_17 = arith.constant 10 : i32
    %55 = vector.broadcast %c10_i32_17 : i32 to vector<128x128xi32>
    %56 = arith.subi %42, %55 : vector<128x128xi32>
    %c3_i32_18 = arith.constant 3 : i32
    %c0_i32 = arith.constant 0 : i32
    %57 = arith.cmpi eq, %c3_i32_18, %c0_i32 : i32
    %c1_i32 = arith.constant 1 : i32
    %58 = arith.select %57, %c1_i32, %c3_i32_18 : i32
    %59 = vector.broadcast %58 : i32 to vector<128x128xi32>
    %60 = arith.remsi %56, %59 : vector<128x128xi32>
    %c0_i32_19 = arith.constant 0 : i32
    %61 = vector.broadcast %c0_i32_19 : i32 to vector<128x128xi32>
    %62 = arith.cmpi ne, %60, %61 : vector<128x128xi32>
    %c0_i32_20 = arith.constant 0 : i32
    %63 = vector.broadcast %c0_i32_20 : i32 to vector<128x128xi32>
    %64 = arith.cmpi slt, %60, %63 : vector<128x128xi32>
    %c0_i32_21 = arith.constant 0 : i32
    %65 = arith.cmpi slt, %58, %c0_i32_21 : i32
    %66 = vector.broadcast %65 : i1 to vector<128x128xi1>
    %67 = vector.broadcast %66 : vector<128x128xi1> to vector<128x128xi1>
    %68 = arith.xori %64, %67 : vector<128x128xi1>
    %69 = arith.andi %68, %62 : vector<128x128xi1>
    %70 = vector.broadcast %58 : i32 to vector<128x128xi32>
    %71 = arith.addi %60, %70 : vector<128x128xi32>
    %72 = arith.select %69, %71, %60 : vector<128x128xi1>, vector<128x128xi32>
    %c10_i32_22 = arith.constant 10 : i32
    %73 = vector.broadcast %c10_i32_22 : i32 to vector<128x128xi32>
    %74 = arith.subi %43, %73 : vector<128x128xi32>
    %75 = arith.cmpi eq, %72, %74 : vector<128x128xi32>
    %76 = arith.andi %54, %75 : vector<128x128xi1>
    %77 = arith.extui %76 : vector<128x128xi1> to vector<128x128xi32>
    %78 = arith.sitofp %77 : vector<128x128xi32> to vector<128x128xf32>
    %cst_23 = arith.constant dense<0.000000e+00> : vector<16x128xf32>
    %79 = tpu.matmul %41, %78, %cst_23 {dimension_numbers = #tpu.dot_dimension_numbers<[1], [0], [0], [1], [0, 0, 1, 1], [], []>} : vector<16x128xf32>, vector<128x128xf32>, vector<16x128xf32> -> vector<16x128xf32>
    %80 = math.tanh %79 : vector<16x128xf32>
    %cst_24 = arith.constant 3.14159274 : f32
    %81 = vector.broadcast %cst_24 : f32 to vector<16x128xf32>
    %82 = arith.mulf %81, %80 : vector<16x128xf32>
    %83 = arith.select %17, %14, %82 : vector<16x128xi1>, vector<16x128xf32>
    %c0_25 = arith.constant 0 : index
    %c0_26 = arith.constant 0 : index
    %84 = vector.load %arg4[%c0_25, %c0_26] : memref<16x128xf32, #tpu.memory_space<vmem>>, vector<16x128xf32>
    tpu.vector_store %arg4[%c0_25, %c0_26], %83 {strides = array<i32>} : memref<16x128xf32, #tpu.memory_space<vmem>>, vector<16x128xf32>,
    return
  }
}

</mosaic_0001>

<llo_original>
// kernel: joint_cat_pose_forward.1
$region0: #{joint_cat_pose_forward.1}
  #allocation0 [shape = 'u32[]', space=smem, size = 0x4, offset = 0x4, fixed_abs, tag = 'smem constant byte address 0x4 - core index']
  #allocation1 [shape = 'u32[144,128]{1,0:T(1,128)}', space=vmem, size = 0x12000, scoped, tag = 'internal scratch']
  %s0 = inlined_call_operand.vmem [shape: bf16[16,1024], index: 0, kind: input, shape index: {}]
  %s1 = inlined_call_operand.vmem [shape: bf16[32,1024], index: 1, kind: input, shape index: {}]
  %s2 = inlined_call_operand.vmem [shape: bf16[32,128], index: 2, kind: input, shape index: {}]
  %s3 = inlined_call_operand.vmem [shape: f32[2,128], index: 3, kind: input, shape index: {}]
  %s4 = inlined_call_operand.vmem [shape: f32[16,128], index: 4, kind: output, shape index: {}]
  %s5 = sld [smem:[#allocation0]]
  $region26: #{joint_cat_pose_forward.1} parent=0
    _
  %s7 = ssub.s32 1, %s5
  %s8 = scalar_select 0, %s7, %s5
  // Predicated region
  $region2: #{joint_cat_pose_forward.1} parent=0 // pred_check
    _
  $region3: #{joint_cat_pose_forward.1} parent=0 // pred_check_branch
    %10 = sbr.rel (0) target = $region5
  $region4: #{joint_cat_pose_forward.1} parent=0 // pred_region
    _
  $region5: #{joint_cat_pose_forward.1} parent=0 // pred_fallthru
    _
  // Predicated region
  $region6: #{joint_cat_pose_forward.1} parent=0 // pred_check
    _
  $region7: #{joint_cat_pose_forward.1} parent=0 // pred_check_branch
    %12 = sbr.rel (0) target = $region9
  $region8: #{joint_cat_pose_forward.1} parent=0 // pred_region
    _
  $region9: #{joint_cat_pose_forward.1} parent=0 // pred_fallthru
    _
  // Predicated region
  $region10: #{joint_cat_pose_forward.1} parent=0 // pred_check
    _
  $region11: #{joint_cat_pose_forward.1} parent=0 // pred_check_branch
    %14 = sbr.rel (0) target = $region13
  $region12: #{joint_cat_pose_forward.1} parent=0 // pred_region
    _
  $region13: #{joint_cat_pose_forward.1} parent=0 // pred_fallthru
    _
  // Predicated region
  $region14: #{joint_cat_pose_forward.1} parent=0 // pred_check
    _
  $region15: #{joint_cat_pose_forward.1} parent=0 // pred_check_branch
    %16 = sbr.rel (0) target = $region17
  $region16: #{joint_cat_pose_forward.1} parent=0 // pred_region
    _
  $region17: #{joint_cat_pose_forward.1} parent=0 // pred_fallthru
    _
  %v18 = vld [vmem:[%s3] sm:$0x3]
  %v19 = vld [vmem:[%s0] sm:$0xff]
  %v20 = vld [vmem:[%s0 + $0x8] sm:$0xff]
  %v21 = vld [vmem:[%s0 + $0x10] sm:$0xff]
  %v22 = vld [vmem:[%s0 + $0x18] sm:$0xff]
  %v23 = vld [vmem:[%s0 + $0x20] sm:$0xff]
  %v24 = vld [vmem:[%s0 + $0x28] sm:$0xff]
  %v25 = vld [vmem:[%s0 + $0x30] sm:$0xff]
  %v26 = vld [vmem:[%s0 + $0x38] sm:$0xff]
  %v27 = vld [vmem:[%s1] sm:$0xff]
  %v28 = vld [vmem:[%s1 + $0x8] sm:$0xff]
  %v29 = vld [vmem:[%s1 + $0x10] sm:$0xff]
  %v30 = vld [vmem:[%s1 + $0x18] sm:$0xff]
  %v31 = vld [vmem:[%s1 + $0x20] sm:$0xff]
  %v32 = vld [vmem:[%s1 + $0x28] sm:$0xff]
  %v33 = vld [vmem:[%s1 + $0x30] sm:$0xff]
  %v34 = vld [vmem:[%s1 + $0x38] sm:$0xff]
  %v35 = vld [vmem:[%s1 + $0x40] sm:$0xff]
  %v36 = vld [vmem:[%s1 + $0x48] sm:$0xff]
  %v37 = vld [vmem:[%s1 + $0x50] sm:$0xff]
  %v38 = vld [vmem:[%s1 + $0x58] sm:$0xff]
  %v39 = vld [vmem:[%s1 + $0x60] sm:$0xff]
  %v40 = vld [vmem:[%s1 + $0x68] sm:$0xff]
  %v41 = vld [vmem:[%s1 + $0x70] sm:$0xff]
  %v42 = vld [vmem:[%s1 + $0x78] sm:$0xff]
  %v43 = vlaneseq
  %v44 = vshrl.u32 %v43, 7
  %v45 = vsub.s32 0, %v44
  %v46 = vrot.slane %v18, %v45
  %v55 = vunpack.c.l.b16 %v19
  %v56 = vunpack.c.h.b16 %v19
  %v57 = vunpack.c.l.b16 %v20
  %v58 = vunpack.c.h.b16 %v20
  %v59 = vunpack.c.l.b16 %v21
  %v60 = vunpack.c.h.b16 %v21
  %v61 = vunpack.c.l.b16 %v22
  %v62 = vunpack.c.h.b16 %v22
  %v63 = vunpack.c.l.b16 %v23
  %v64 = vunpack.c.h.b16 %v23
  %v65 = vunpack.c.l.b16 %v24
  %v66 = vunpack.c.h.b16 %v24
  %v67 = vunpack.c.l.b16 %v25
  %v68 = vunpack.c.h.b16 %v25
  %v69 = vunpack.c.l.b16 %v26
  %v70 = vunpack.c.h.b16 %v26
  %v71 = vpack.c.b16 %v63, %v55
  %v72 = vpack.c.b16 %v64, %v56
  %v73 = vpack.c.b16 %v65, %v57
  %v74 = vpack.c.b16 %v66, %v58
  %v75 = vpack.c.b16 %v67, %v59
  %v76 = vpack.c.b16 %v68, %v60
  %v77 = vpack.c.b16 %v69, %v61
  %v78 = vpack.c.b16 %v70, %v62
  %v103 = vunpack.c.l.b16 %v27
  %v104 = vunpack.c.h.b16 %v27
  %v105 = vunpack.c.l.b16 %v28
  %v106 = vunpack.c.h.b16 %v28
  %v107 = vunpack.c.l.b16 %v29
  %v108 = vunpack.c.h.b16 %v29
  %v109 = vunpack.c.l.b16 %v30
  %v110 = vunpack.c.h.b16 %v30
  %v111 = vunpack.c.l.b16 %v31
  %v112 = vunpack.c.h.b16 %v31
  %v113 = vunpack.c.l.b16 %v32
  %v114 = vunpack.c.h.b16 %v32
  %v115 = vunpack.c.l.b16 %v33
  %v116 = vunpack.c.h.b16 %v33
  %v117 = vunpack.c.l.b16 %v34
  %v118 = vunpack.c.h.b16 %v34
  %v119 = vunpack.c.l.b16 %v35
  %v120 = vunpack.c.h.b16 %v35
  %v121 = vunpack.c.l.b16 %v36
  %v122 = vunpack.c.h.b16 %v36
  %v123 = vunpack.c.l.b16 %v37
  %v124 = vunpack.c.h.b16 %v37
  %v125 = vunpack.c.l.b16 %v38
  %v126 = vunpack.c.h.b16 %v38
  %v127 = vunpack.c.l.b16 %v39
  %v128 = vunpack.c.h.b16 %v39
  %v129 = vunpack.c.l.b16 %v40
  %v130 = vunpack.c.h.b16 %v40
  %v131 = vunpack.c.l.b16 %v41
  %v132 = vunpack.c.h.b16 %v41
  %v133 = vunpack.c.l.b16 %v42
  %v134 = vunpack.c.h.b16 %v42
  %v135 = vpack.c.b16 %v111, %v103
  %v136 = vpack.c.b16 %v112, %v104
  %v137 = vpack.c.b16 %v113, %v105
  %v138 = vpack.c.b16 %v114, %v106
  %v139 = vpack.c.b16 %v115, %v107
  %v140 = vpack.c.b16 %v116, %v108
  %v141 = vpack.c.b16 %v117, %v109
  %v142 = vpack.c.b16 %v118, %v110
  %v143 = vpack.c.b16 %v127, %v119
  %v144 = vpack.c.b16 %v128, %v120
  %v145 = vpack.c.b16 %v129, %v121
  %v146 = vpack.c.b16 %v130, %v122
  %v147 = vpack.c.b16 %v131, %v123
  %v148 = vpack.c.b16 %v132, %v124
  %v149 = vpack.c.b16 %v133, %v125
  %v150 = vpack.c.b16 %v134, %v126
  %167 = vmatprep.subr.bf16.mxu0 %v136
  %168 = vmatpush1.bf16.xpose.msra.mxu0 %v135
  %169 = vmatprep.subr.bf16.mxu0 %v144
  %170 = vmatpush1.bf16.xpose.msra.mxu0 %v143
  %171 = vmatprep.subr.bf16.mxu0 0
  %172 = vmatpush1.bf16.xpose.msra.mxu0 0
  %173 = vmatprep.subr.bf16.mxu0 0
  %174 = vmatpush1.bf16.xpose.msra.mxu0 0
  %175 = vmatprep.subr.bf16.mxu0 0
  %176 = vmatpush1.bf16.xpose.msra.mxu0 0
  %177 = vmatprep.subr.bf16.mxu0 0
  %178 = vmatpush1.bf16.xpose.msra.mxu0 0
  %179 = vmatprep.subr.bf16.mxu0 0
  %180 = vmatpush1.bf16.xpose.msra.mxu0 0
  %181 = vmatprep.subr.bf16.mxu0 0
  %182 = vmatpush1.bf16.xpose.msra.mxu0 0
  %183 = vmatprep.subr.bf16.mxu0 0
  %184 = vmatpush1.bf16.xpose.msra.mxu0 0
  %185 = vmatprep.subr.bf16.mxu0 0
  %186 = vmatpush1.bf16.xpose.msra.mxu0 0
  %187 = vmatprep.subr.bf16.mxu0 0
  %188 = vmatpush1.bf16.xpose.msra.mxu0 0
  %189 = vmatprep.subr.bf16.mxu0 0
  %190 = vmatpush1.bf16.xpose.msra.mxu0 0
  %191 = vmatprep.subr.bf16.mxu0 0
  %192 = vmatpush1.bf16.xpose.msra.mxu0 0
  %193 = vmatprep.subr.bf16.mxu0 0
  %194 = vmatpush1.bf16.xpose.msra.mxu0 0
  %195 = vmatprep.subr.bf16.mxu0 0
  %196 = vmatpush1.bf16.xpose.msra.mxu0 0
  %197 = vmatprep.subr.bf16.mxu0 0
  %198 = vmatpush1.bf16.xpose.msra.mxu0 0
  %199 = vmatprep.mubr.bf16.mxu0 %v72
  %200 = vmatmul.mubr.bf16.gmra.mrb[0].mxu0 %v71
  %v201 = vpop.f32.mrb[0].mxu0
  %v202 = vadd.f32 %v46, %v201
  %v203 = vpop.f32.mrb[0].mxu0
  %v204 = vpop.f32.mrb[0].mxu0
  %v205 = vadd.f32 %v46, %v204
  %v206 = vpop.f32.mrb[0].mxu0
  %207 = vdwg.mxu0
  %208 = vmatprep.subr.bf16.mxu0 %v138
  %209 = vmatpush1.bf16.xpose.msra.mxu0 %v137
  %210 = vmatprep.subr.bf16.mxu0 %v146
  %211 = vmatpush1.bf16.xpose.msra.mxu0 %v145
  %212 = vmatprep.subr.bf16.mxu0 0
  %213 = vmatpush1.bf16.xpose.msra.mxu0 0
  %214 = vmatprep.subr.bf16.mxu0 0
  %215 = vmatpush1.bf16.xpose.msra.mxu0 0
  %216 = vmatprep.subr.bf16.mxu0 0
  %217 = vmatpush1.bf16.xpose.msra.mxu0 0
  %218 = vmatprep.subr.bf16.mxu0 0
  %219 = vmatpush1.bf16.xpose.msra.mxu0 0
  %220 = vmatprep.subr.bf16.mxu0 0
  %221 = vmatpush1.bf16.xpose.msra.mxu0 0
  %222 = vmatprep.subr.bf16.mxu0 0
  %223 = vmatpush1.bf16.xpose.msra.mxu0 0
  %224 = vmatprep.subr.bf16.mxu0 0
  %225 = vmatpush1.bf16.xpose.msra.mxu0 0
  %226 = vmatprep.subr.bf16.mxu0 0
  %227 = vmatpush1.bf16.xpose.msra.mxu0 0
  %228 = vmatprep.subr.bf16.mxu0 0
  %229 = vmatpush1.bf16.xpose.msra.mxu0 0
  %230 = vmatprep.subr.bf16.mxu0 0
  %231 = vmatpush1.bf16.xpose.msra.mxu0 0
  %232 = vmatprep.subr.bf16.mxu0 0
  %233 = vmatpush1.bf16.xpose.msra.mxu0 0
  %234 = vmatprep.subr.bf16.mxu0 0
  %235 = vmatpush1.bf16.xpose.msra.mxu0 0
  %236 = vmatprep.subr.bf16.mxu0 0
  %237 = vmatpush1.bf16.xpose.msra.mxu0 0
  %238 = vmatprep.subr.bf16.mxu0 0
  %239 = vmatpush1.bf16.xpose.msra.mxu0 0
  %240 = vmatprep.mubr.bf16.mxu0 %v74
  %241 = vmatmul.mubr.bf16.gmra.mrb[0].mxu0 %v73
  %v242 = vpop.f32.mrb[0].mxu0
  %v243 = vadd.f32 %v202, %v242
  %v244 = vpop.f32.mrb[0].mxu0
  %v245 = vpop.f32.mrb[0].mxu0
  %v246 = vadd.f32 %v205, %v245
  %v247 = vpop.f32.mrb[0].mxu0
  %248 = vdwg.mxu0
  %249 = vmatprep.subr.bf16.mxu0 %v140
  %250 = vmatpush1.bf16.xpose.msra.mxu0 %v139
  %251 = vmatprep.subr.bf16.mxu0 %v148
  %252 = vmatpush1.bf16.xpose.msra.mxu0 %v147
  %253 = vmatprep.subr.bf16.mxu0 0
  %254 = vmatpush1.bf16.xpose.msra.mxu0 0
  %255 = vmatprep.subr.bf16.mxu0 0
  %256 = vmatpush1.bf16.xpose.msra.mxu0 0
  %257 = vmatprep.subr.bf16.mxu0 0
  %258 = vmatpush1.bf16.xpose.msra.mxu0 0
  %259 = vmatprep.subr.bf16.mxu0 0
  %260 = vmatpush1.bf16.xpose.msra.mxu0 0
  %261 = vmatprep.subr.bf16.mxu0 0
  %262 = vmatpush1.bf16.xpose.msra.mxu0 0
  %263 = vmatprep.subr.bf16.mxu0 0
  %264 = vmatpush1.bf16.xpose.msra.mxu0 0
  %265 = vmatprep.subr.bf16.mxu0 0
  %266 = vmatpush1.bf16.xpose.msra.mxu0 0
  %267 = vmatprep.subr.bf16.mxu0 0
  %268 = vmatpush1.bf16.xpose.msra.mxu0 0
  %269 = vmatprep.subr.bf16.mxu0 0
  %270 = vmatpush1.bf16.xpose.msra.mxu0 0
  %271 = vmatprep.subr.bf16.mxu0 0
  %272 = vmatpush1.bf16.xpose.msra.mxu0 0
  %273 = vmatprep.subr.bf16.mxu0 0
  %274 = vmatpush1.bf16.xpose.msra.mxu0 0
  %275 = vmatprep.subr.bf16.mxu0 0
  %276 = vmatpush1.bf16.xpose.msra.mxu0 0
  %277 = vmatprep.subr.bf16.mxu0 0
  %278 = vmatpush1.bf16.xpose.msra.mxu0 0
  %279 = vmatprep.subr.bf16.mxu0 0
  %280 = vmatpush1.bf16.xpose.msra.mxu0 0
  %281 = vmatprep.mubr.bf16.mxu0 %v76
  %282 = vmatmul.mubr.bf16.gmra.mrb[0].mxu0 %v75
  %v283 = vpop.f32.mrb[0].mxu0
  %v284 = vadd.f32 %v243, %v283
  %v285 = vpop.f32.mrb[0].mxu0
  %v286 = vpop.f32.mrb[0].mxu0
  %v287 = vadd.f32 %v246, %v286
  %v288 = vpop.f32.mrb[0].mxu0
  %289 = vdwg.mxu0
  %290 = vmatprep.subr.bf16.mxu0 %v142
  %291 = vmatpush1.bf16.xpose.msra.mxu0 %v141
  %292 = vmatprep.subr.bf16.mxu0 %v150
  %293 = vmatpush1.bf16.xpose.msra.mxu0 %v149
  %294 = vmatprep.subr.bf16.mxu0 0
  %295 = vmatpush1.bf16.xpose.msra.mxu0 0
  %296 = vmatprep.subr.bf16.mxu0 0
  %297 = vmatpush1.bf16.xpose.msra.mxu0 0
  %298 = vmatprep.subr.bf16.mxu0 0
  %299 = vmatpush1.bf16.xpose.msra.mxu0 0
  %300 = vmatprep.subr.bf16.mxu0 0
  %301 = vmatpush1.bf16.xpose.msra.mxu0 0
  %302 = vmatprep.subr.bf16.mxu0 0
  %303 = vmatpush1.bf16.xpose.msra.mxu0 0
  %304 = vmatprep.subr.bf16.mxu0 0
  %305 = vmatpush1.bf16.xpose.msra.mxu0 0
  %306 = vmatprep.subr.bf16.mxu0 0
  %307 = vmatpush1.bf16.xpose.msra.mxu0 0
  %308 = vmatprep.subr.bf16.mxu0 0
  %309 = vmatpush1.bf16.xpose.msra.mxu0 0
  %310 = vmatprep.subr.bf16.mxu0 0
  %311 = vmatpush1.bf16.xpose.msra.mxu0 0
  %312 = vmatprep.subr.bf16.mxu0 0
  %313 = vmatpush1.bf16.xpose.msra.mxu0 0
  %314 = vmatprep.subr.bf16.mxu0 0
  %315 = vmatpush1.bf16.xpose.msra.mxu0 0
  %316 = vmatprep.subr.bf16.mxu0 0
  %317 = vmatpush1.bf16.xpose.msra.mxu0 0
  %318 = vmatprep.subr.bf16.mxu0 0
  %319 = vmatpush1.bf16.xpose.msra.mxu0 0
  %320 = vmatprep.subr.bf16.mxu0 0
  %321 = vmatpush1.bf16.xpose.msra.mxu0 0
  %322 = vmatprep.mubr.bf16.mxu0 %v78
  %323 = vmatmul.mubr.bf16.gmra.mrb[0].mxu0 %v77
  %v324 = vpop.f32.mrb[0].mxu0
  %v325 = vadd.f32 %v284, %v324
  %v326 = vpop.f32.mrb[0].mxu0
  %v327 = vpop.f32.mrb[0].mxu0
  %v328 = vadd.f32 %v287, %v327
  %v329 = vpop.f32.mrb[0].mxu0
  %330 = vdwg.mxu0
  %v331 = vmax.f32 %v325, 0.0
  %v332 = vmax.f32 %v328, 0.0
  %v333 = vpack.c.bf16 %v332, %v331
  %v334 = vld [vmem:[%s2] sm:$0xf]
  %v335 = vld [vmem:[%s2 + $0x4] sm:$0xf]
  %v336 = vld [vmem:[%s2 + $0x8] sm:$0xf]
  %v337 = vld [vmem:[%s2 + $0xc] sm:$0xf]
  %v338 = vlaneseq
  %v339 = vshrl.u32 %v338, 7
  %v340 = vsub.s32 1, %v339
  %v341 = vrot.slane %v18, %v340
  %v346 = vunpack.c.l.b16 %v334
  %v347 = vunpack.c.l.b16 %v335
  %v348 = vunpack.c.l.b16 %v336
  %v349 = vunpack.c.l.b16 %v337
  %v350 = vpack.c.b16 %v347, %v346
  %v351 = vpack.c.b16 %v349, %v348
  %vm354 = vcmask 261120
  %v356 = vsel %vm354, %v333, 0
  %358 = vmatprep.subr.bf16.mxu0 0
  %359 = vmatpush1.bf16.msra.mxu0 %v350
  %360 = vmatprep.subr.bf16.mxu0 0
  %361 = vmatpush1.bf16.msra.mxu0 %v351
  %362 = vmatprep.subr.bf16.mxu0 0
  %363 = vmatpush1.bf16.msra.mxu0 0
  %364 = vmatprep.subr.bf16.mxu0 0
  %365 = vmatpush1.bf16.msra.mxu0 0
  %366 = vmatprep.subr.bf16.mxu0 0
  %367 = vmatpush1.bf16.msra.mxu0 0
  %368 = vmatprep.subr.bf16.mxu0 0
  %369 = vmatpush1.bf16.msra.mxu0 0
  %370 = vmatprep.subr.bf16.mxu0 0
  %371 = vmatpush1.bf16.msra.mxu0 0
  %372 = vmatprep.subr.bf16.mxu0 0
  %373 = vmatpush1.bf16.msra.mxu0 0
  %374 = vmatprep.subr.bf16.mxu0 0
  %375 = vmatpush1.bf16.msra.mxu0 0
  %376 = vmatprep.subr.bf16.mxu0 0
  %377 = vmatpush1.bf16.msra.mxu0 0
  %378 = vmatprep.subr.bf16.mxu0 0
  %379 = vmatpush1.bf16.msra.mxu0 0
  %380 = vmatprep.subr.bf16.mxu0 0
  %381 = vmatpush1.bf16.msra.mxu0 0
  %382 = vmatprep.subr.bf16.mxu0 0
  %383 = vmatpush1.bf16.msra.mxu0 0
  %384 = vmatprep.subr.bf16.mxu0 0
  %385 = vmatpush1.bf16.msra.mxu0 0
  %386 = vmatprep.subr.bf16.mxu0 0
  %387 = vmatpush1.bf16.msra.mxu0 0
  %388 = vmatprep.subr.bf16.mxu0 0
  %389 = vmatpush1.bf16.msra.mxu0 0
  %390 = vmatprep.mubr.bf16.mxu0 0
  %391 = vmatmul.mubr.bf16.gmra.mrb[0].mxu0 %v356
  %v392 = vpop.f32.mrb[0].mxu0
  %v393 = vadd.f32 %v341, %v392
  %v394 = vpop.f32.mrb[0].mxu0
  %v395 = vpop.f32.mrb[0].mxu0
  %v396 = vadd.f32 %v341, %v395
  %v397 = vpop.f32.mrb[0].mxu0
  %398 = vdwg.mxu0
  %v399 = vlaneseq
  %v400 = vand.u32 %v399, 127
  %vm401 = vcmp.lt.s32.totalorder %v400, 10
  %v402 = vsel %vm401, %v393, -inf
  %v403 = vsel %vm401, %v396, -inf
  %404 = vmax.xlane.f32.xlu0 %v402
  %v405 = vpop.xlane.xlu0 %404
  %406 = vmax.xlane.f32.xlu0 %v403
  %v407 = vpop.xlane.xlu0 %406
  %vm408 = vcmp.eq.f32.partialorder %v393, %v405
  %vm409 = vcmp.eq.f32.partialorder %v396, %v407
  %vm410 = vmand %vm401, %vm408
  %vm411 = vmand %vm401, %vm409
  %v412 = vsel %vm410, %v400, 128
  %v413 = vsel %vm411, %v400, 128
  %v414 = vand.u32 %v412, 65535
  %v415 = vshra.s32 %v412, 16
  %v416 = vcvt.s32.f32 %v414
  %v417 = vcvt.s32.f32 %v415
  %418 = vmin.xlane.f32.xlu0 %v417
  %v419 = vpop.xlane.xlu0 %418
  %vm420 = vcmp.eq.f32.partialorder %v417, %v419
  %v421 = vsel %vm420, %v416, inf
  %422 = vmin.xlane.f32.xlu0 %v421
  %v423 = vpop.xlane.xlu0 %422
  %v424 = vcvt.f32.s32 %v423
  %v425 = vcvt.f32.s32 %v419
  %v426 = vshll.u32 %v425, 16
  %v427 = vadd.s32 %v426, %v424
  %v428 = vand.u32 %v413, 65535
  %v429 = vshra.s32 %v413, 16
  %v430 = vcvt.s32.f32 %v428
  %v431 = vcvt.s32.f32 %v429
  %432 = vmin.xlane.f32.xlu0 %v431
  %v433 = vpop.xlane.xlu0 %432
  %vm434 = vcmp.eq.f32.partialorder %v431, %v433
  %v435 = vsel %vm434, %v430, inf
  %436 = vmin.xlane.f32.xlu0 %v435
  %v437 = vpop.xlane.xlu0 %436
  %v438 = vcvt.f32.s32 %v437
  %v439 = vcvt.f32.s32 %v433
  %v440 = vshll.u32 %v439, 16
  %v441 = vadd.s32 %v440, %v438
  %v442 = vmul.u32 %v427, 3
  %v443 = vmul.u32 %v441, 3
  %v444 = vadd.s32 %v442, 10
  %v445 = vadd.s32 %v443, 10
  %vm446 = vcmp.ge.s32.totalorder %v400, %v444
  %vm447 = vcmp.ge.s32.totalorder %v400, %v445
  %v448 = vadd.s32 %v444, 3
  %v449 = vadd.s32 %v445, 3
  %vm450 = vcmp.lt.s32.totalorder %v400, %v448
  %vm451 = vcmp.lt.s32.totalorder %v400, %v449
  %vm452 = vmand %vm446, %vm450
  %vm453 = vmand %vm447, %vm451
  %v454 = vsel %vm452, %v393, 0.0
  %v455 = vsel %vm453, %v396, 0.0
  %v456 = vlaneseq
  %v457 = vshrl.u32 %v456, 7
  %v458 = vadd.s32 %v457, 8
  %v459 = vadd.s32 %v457, 16
  %v460 = vadd.s32 %v457, 24
  %v461 = vadd.s32 %v457, 32
  %v462 = vadd.s32 %v457, 40
  %v463 = vadd.s32 %v457, 48
  %v464 = vadd.s32 %v457, 56
  %v465 = vadd.s32 %v457, 64
  %v466 = vadd.s32 %v457, 72
  %v467 = vadd.s32 %v457, 80
  %v468 = vadd.s32 %v457, 88
  %v469 = vadd.s32 %v457, 96
  %v470 = vadd.s32 %v457, 104
  %v471 = vadd.s32 %v457, 112
  %v472 = vadd.s32 %v457, 120
  %vm473 = vcmp.ge.s32.totalorder %v457, 10
  %vm474 = vcmp.ge.s32.totalorder %v458, 10
  %vm475 = vcmp.ge.s32.totalorder %v459, 10
  %vm476 = vcmp.ge.s32.totalorder %v460, 10
  %vm477 = vcmp.ge.s32.totalorder %v461, 10
  %vm478 = vcmp.ge.s32.totalorder %v462, 10
  %vm479 = vcmp.ge.s32.totalorder %v463, 10
  %vm480 = vcmp.ge.s32.totalorder %v464, 10
  %vm481 = vcmp.ge.s32.totalorder %v465, 10
  %vm482 = vcmp.ge.s32.totalorder %v466, 10
  %vm483 = vcmp.ge.s32.totalorder %v467, 10
  %vm484 = vcmp.ge.s32.totalorder %v468, 10
  %vm485 = vcmp.ge.s32.totalorder %v469, 10
  %vm486 = vcmp.ge.s32.totalorder %v470, 10
  %vm487 = vcmp.ge.s32.totalorder %v471, 10
  %vm488 = vcmp.ge.s32.totalorder %v472, 10
  %vm489 = vcmp.lt.s32.totalorder %v457, 40
  %vm490 = vcmp.lt.s32.totalorder %v458, 40
  %vm491 = vcmp.lt.s32.totalorder %v459, 40
  %vm492 = vcmp.lt.s32.totalorder %v460, 40
  %vm493 = vcmp.lt.s32.totalorder %v461, 40
  %vm494 = vcmp.lt.s32.totalorder %v462, 40
  %vm495 = vcmp.lt.s32.totalorder %v463, 40
  %vm496 = vcmp.lt.s32.totalorder %v464, 40
  %vm497 = vcmp.lt.s32.totalorder %v465, 40
  %vm498 = vcmp.lt.s32.totalorder %v466, 40
  %vm499 = vcmp.lt.s32.totalorder %v467, 40
  %vm500 = vcmp.lt.s32.totalorder %v468, 40
  %vm501 = vcmp.lt.s32.totalorder %v469, 40
  %vm502 = vcmp.lt.s32.totalorder %v470, 40
  %vm503 = vcmp.lt.s32.totalorder %v471, 40
  %vm504 = vcmp.lt.s32.totalorder %v472, 40
  %vm505 = vmand %vm473, %vm489
  %vm506 = vmand %vm474, %vm490
  %vm507 = vmand %vm475, %vm491
  %vm508 = vmand %vm476, %vm492
  %vm509 = vmand %vm477, %vm493
  %vm510 = vmand %vm478, %vm494
  %vm511 = vmand %vm479, %vm495
  %vm512 = vmand %vm480, %vm496
  %vm513 = vmand %vm481, %vm497
  %vm514 = vmand %vm482, %vm498
  %vm515 = vmand %vm483, %vm499
  %vm516 = vmand %vm484, %vm500
  %vm517 = vmand %vm485, %vm501
  %vm518 = vmand %vm486, %vm502
  %vm519 = vmand %vm487, %vm503
  %vm520 = vmand %vm488, %vm504
  %vm521 = vcmp.ge.s32.totalorder %v400, 10
  %vm522 = vmand %vm505, %vm521
  %vm523 = vmand %vm506, %vm521
  %vm524 = vmand %vm507, %vm521
  %vm525 = vmand %vm508, %vm521
  %vm526 = vmand %vm509, %vm521
  %vm527 = vmand %vm510, %vm521
  %vm528 = vmand %vm511, %vm521
  %vm529 = vmand %vm512, %vm521
  %vm530 = vmand %vm513, %vm521
  %vm531 = vmand %vm514, %vm521
  %vm532 = vmand %vm515, %vm521
  %vm533 = vmand %vm516, %vm521
  %vm534 = vmand %vm517, %vm521
  %vm535 = vmand %vm518, %vm521
  %vm536 = vmand %vm519, %vm521
  %vm537 = vmand %vm520, %vm521
  %vm538 = vcmp.lt.s32.totalorder %v400, 13
  %vm539 = vmand %vm522, %vm538
  %vm540 = vmand %vm523, %vm538
  %vm541 = vmand %vm524, %vm538
  %vm542 = vmand %vm525, %vm538
  %vm543 = vmand %vm526, %vm538
  %vm544 = vmand %vm527, %vm538
  %vm545 = vmand %vm528, %vm538
  %vm546 = vmand %vm529, %vm538
  %vm547 = vmand %vm530, %vm538
  %vm548 = vmand %vm531, %vm538
  %vm549 = vmand %vm532, %vm538
  %vm550 = vmand %vm533, %vm538
  %vm551 = vmand %vm534, %vm538
  %vm552 = vmand %vm535, %vm538
  %vm553 = vmand %vm536, %vm538
  %vm554 = vmand %vm537, %vm538
  %v555 = vsub.s32 %v457, 10
  %v556 = vsub.s32 %v458, 10
  %v557 = vsub.s32 %v459, 10
  %v558 = vsub.s32 %v460, 10
  %v559 = vsub.s32 %v461, 10
  %v560 = vsub.s32 %v462, 10
  %v561 = vsub.s32 %v463, 10
  %v562 = vsub.s32 %v464, 10
  %v563 = vsub.s32 %v465, 10
  %v564 = vsub.s32 %v466, 10
  %v565 = vsub.s32 %v467, 10
  %v566 = vsub.s32 %v468, 10
  %v567 = vsub.s32 %v469, 10
  %v568 = vsub.s32 %v470, 10
  %v569 = vsub.s32 %v471, 10
  %v570 = vsub.s32 %v472, 10
  %vm571 = vcmp.lt.s32.totalorder %v555, 0
  %v572 = vsub.s32 0, %v555
  %v573 = vsel %vm571, %v572, %v555
  %v574 = vmul.u32.u64.compose %v573, 2863311531
  %v575 = vextract.low.u32 %v574
  %v576 = vextract.high.u32 %v574
  %v577 = vshrl.u32 %v576, 1
  %v578 = vmul.u32 %v577, 3
  %v579 = vsub.s32 %v573, %v578
  %v580 = vsub.s32 0, %v579
  %v581 = vsel %vm571, %v580, %v579
  %vm582 = vcmp.lt.s32.totalorder %v556, 0
  %v583 = vsub.s32 0, %v556
  %v584 = vsel %vm582, %v583, %v556
  %v585 = vmul.u32.u64.compose %v584, 2863311531
  %v586 = vextract.low.u32 %v585
  %v587 = vextract.high.u32 %v585
  %v588 = vshrl.u32 %v587, 1
  %v589 = vmul.u32 %v588, 3
  %v590 = vsub.s32 %v584, %v589
  %v591 = vsub.s32 0, %v590
  %v592 = vsel %vm582, %v591, %v590
  %vm593 = vcmp.lt.s32.totalorder %v557, 0
  %v594 = vsub.s32 0, %v557
  %v595 = vsel %vm593, %v594, %v557
  %v596 = vmul.u32.u64.compose %v595, 2863311531
  %v597 = vextract.low.u32 %v596
  %v598 = vextract.high.u32 %v596
  %v599 = vshrl.u32 %v598, 1
  %v600 = vmul.u32 %v599, 3
  %v601 = vsub.s32 %v595, %v600
  %v602 = vsub.s32 0, %v601
  %v603 = vsel %vm593, %v602, %v601
  %vm604 = vcmp.lt.s32.totalorder %v558, 0
  %v605 = vsub.s32 0, %v558
  %v606 = vsel %vm604, %v605, %v558
  %v607 = vmul.u32.u64.compose %v606, 2863311531
  %v608 = vextract.low.u32 %v607
  %v609 = vextract.high.u32 %v607
  %v610 = vshrl.u32 %v609, 1
  %v611 = vmul.u32 %v610, 3
  %v612 = vsub.s32 %v606, %v611
  %v613 = vsub.s32 0, %v612
  %v614 = vsel %vm604, %v613, %v612
  %vm615 = vcmp.lt.s32.totalorder %v559, 0
  %v616 = vsub.s32 0, %v559
  %v617 = vsel %vm615, %v616, %v559
  %v618 = vmul.u32.u64.compose %v617, 2863311531
  %v619 = vextract.low.u32 %v618
  %v620 = vextract.high.u32 %v618
  %v621 = vshrl.u32 %v620, 1
  %v622 = vmul.u32 %v621, 3
  %v623 = vsub.s32 %v617, %v622
  %v624 = vsub.s32 0, %v623
  %v625 = vsel %vm615, %v624, %v623
  %vm626 = vcmp.lt.s32.totalorder %v560, 0
  %v627 = vsub.s32 0, %v560
  %v628 = vsel %vm626, %v627, %v560
  %v629 = vmul.u32.u64.compose %v628, 2863311531
  %v630 = vextract.low.u32 %v629
  %v631 = vextract.high.u32 %v629
  %v632 = vshrl.u32 %v631, 1
  %v633 = vmul.u32 %v632, 3
  %v634 = vsub.s32 %v628, %v633
  %v635 = vsub.s32 0, %v634
  %v636 = vsel %vm626, %v635, %v634
  %vm637 = vcmp.lt.s32.totalorder %v561, 0
  %v638 = vsub.s32 0, %v561
  %v639 = vsel %vm637, %v638, %v561
  %v640 = vmul.u32.u64.compose %v639, 2863311531
  %v641 = vextract.low.u32 %v640
  %v642 = vextract.high.u32 %v640
  %v643 = vshrl.u32 %v642, 1
  %v644 = vmul.u32 %v643, 3
  %v645 = vsub.s32 %v639, %v644
  %v646 = vsub.s32 0, %v645
  %v647 = vsel %vm637, %v646, %v645
  %vm648 = vcmp.lt.s32.totalorder %v562, 0
  %v649 = vsub.s32 0, %v562
  %v650 = vsel %vm648, %v649, %v562
  %v651 = vmul.u32.u64.compose %v650, 2863311531
  %v652 = vextract.low.u32 %v651
  %v653 = vextract.high.u32 %v651
  %v654 = vshrl.u32 %v653, 1
  %v655 = vmul.u32 %v654, 3
  %v656 = vsub.s32 %v650, %v655
  %v657 = vsub.s32 0, %v656
  %v658 = vsel %vm648, %v657, %v656
  %vm659 = vcmp.lt.s32.totalorder %v563, 0
  %v660 = vsub.s32 0, %v563
  %v661 = vsel %vm659, %v660, %v563
  %v662 = vmul.u32.u64.compose %v661, 2863311531
  %v663 = vextract.low.u32 %v662
  %v664 = vextract.high.u32 %v662
  %v665 = vshrl.u32 %v664, 1
  %v666 = vmul.u32 %v665, 3
  %v667 = vsub.s32 %v661, %v666
  %v668 = vsub.s32 0, %v667
  %v669 = vsel %vm659, %v668, %v667
  %vm670 = vcmp.lt.s32.totalorder %v564, 0
  %v671 = vsub.s32 0, %v564
  %v672 = vsel %vm670, %v671, %v564
  %v673 = vmul.u32.u64.compose %v672, 2863311531
  %v674 = vextract.low.u32 %v673
  %v675 = vextract.high.u32 %v673
  %v676 = vshrl.u32 %v675, 1
  %v677 = vmul.u32 %v676, 3
  %v678 = vsub.s32 %v672, %v677
  %v679 = vsub.s32 0, %v678
  %v680 = vsel %vm670, %v679, %v678
  %vm681 = vcmp.lt.s32.totalorder %v565, 0
  %v682 = vsub.s32 0, %v565
  %v683 = vsel %vm681, %v682, %v565
  %v684 = vmul.u32.u64.compose %v683, 2863311531
  %v685 = vextract.low.u32 %v684
  %v686 = vextract.high.u32 %v684
  %v687 = vshrl.u32 %v686, 1
  %v688 = vmul.u32 %v687, 3
  %v689 = vsub.s32 %v683, %v688
  %v690 = vsub.s32 0, %v689
  %v691 = vsel %vm681, %v690, %v689
  %vm692 = vcmp.lt.s32.totalorder %v566, 0
  %v693 = vsub.s32 0, %v566
  %v694 = vsel %vm692, %v693, %v566
  %v695 = vmul.u32.u64.compose %v694, 2863311531
  %v696 = vextract.low.u32 %v695
  %v697 = vextract.high.u32 %v695
  %v698 = vshrl.u32 %v697, 1
  %v699 = vmul.u32 %v698, 3
  %v700 = vsub.s32 %v694, %v699
  %v701 = vsub.s32 0, %v700
  %v702 = vsel %vm692, %v701, %v700
  %vm703 = vcmp.lt.s32.totalorder %v567, 0
  %v704 = vsub.s32 0, %v567
  %v705 = vsel %vm703, %v704, %v567
  %v706 = vmul.u32.u64.compose %v705, 2863311531
  %v707 = vextract.low.u32 %v706
  %v708 = vextract.high.u32 %v706
  %v709 = vshrl.u32 %v708, 1
  %v710 = vmul.u32 %v709, 3
  %v711 = vsub.s32 %v705, %v710
  %v712 = vsub.s32 0, %v711
  %v713 = vsel %vm703, %v712, %v711
  %vm714 = vcmp.lt.s32.totalorder %v568, 0
  %v715 = vsub.s32 0, %v568
  %v716 = vsel %vm714, %v715, %v568
  %v717 = vmul.u32.u64.compose %v716, 2863311531
  %v718 = vextract.low.u32 %v717
  %v719 = vextract.high.u32 %v717
  %v720 = vshrl.u32 %v719, 1
  %v721 = vmul.u32 %v720, 3
  %v722 = vsub.s32 %v716, %v721
  %v723 = vsub.s32 0, %v722
  %v724 = vsel %vm714, %v723, %v722
  %vm725 = vcmp.lt.s32.totalorder %v569, 0
  %v726 = vsub.s32 0, %v569
  %v727 = vsel %vm725, %v726, %v569
  %v728 = vmul.u32.u64.compose %v727, 2863311531
  %v729 = vextract.low.u32 %v728
  %v730 = vextract.high.u32 %v728
  %v731 = vshrl.u32 %v730, 1
  %v732 = vmul.u32 %v731, 3
  %v733 = vsub.s32 %v727, %v732
  %v734 = vsub.s32 0, %v733
  %v735 = vsel %vm725, %v734, %v733
  %vm736 = vcmp.lt.s32.totalorder %v570, 0
  %v737 = vsub.s32 0, %v570
  %v738 = vsel %vm736, %v737, %v570
  %v739 = vmul.u32.u64.compose %v738, 2863311531
  %v740 = vextract.low.u32 %v739
  %v741 = vextract.high.u32 %v739
  %v742 = vshrl.u32 %v741, 1
  %v743 = vmul.u32 %v742, 3
  %v744 = vsub.s32 %v738, %v743
  %v745 = vsub.s32 0, %v744
  %v746 = vsel %vm736, %v745, %v744
  %vm747 = vcmp.ne.s32.totalorder %v581, 0
  %vm748 = vcmp.ne.s32.totalorder %v592, 0
  %vm749 = vcmp.ne.s32.totalorder %v603, 0
  %vm750 = vcmp.ne.s32.totalorder %v614, 0
  %vm751 = vcmp.ne.s32.totalorder %v625, 0
  %vm752 = vcmp.ne.s32.totalorder %v636, 0
  %vm753 = vcmp.ne.s32.totalorder %v647, 0
  %vm754 = vcmp.ne.s32.totalorder %v658, 0
  %vm755 = vcmp.ne.s32.totalorder %v669, 0
  %vm756 = vcmp.ne.s32.totalorder %v680, 0
  %vm757 = vcmp.ne.s32.totalorder %v691, 0
  %vm758 = vcmp.ne.s32.totalorder %v702, 0
  %vm759 = vcmp.ne.s32.totalorder %v713, 0
  %vm760 = vcmp.ne.s32.totalorder %v724, 0
  %vm761 = vcmp.ne.s32.totalorder %v735, 0
  %vm762 = vcmp.ne.s32.totalorder %v746, 0
  %vm763 = vcmp.lt.s32.totalorder %v581, 0
  %vm764 = vcmp.lt.s32.totalorder %v592, 0
  %vm765 = vcmp.lt.s32.totalorder %v603, 0
  %vm766 = vcmp.lt.s32.totalorder %v614, 0
  %vm767 = vcmp.lt.s32.totalorder %v625, 0
  %vm768 = vcmp.lt.s32.totalorder %v636, 0
  %vm769 = vcmp.lt.s32.totalorder %v647, 0
  %vm770 = vcmp.lt.s32.totalorder %v658, 0
  %vm771 = vcmp.lt.s32.totalorder %v669, 0
  %vm772 = vcmp.lt.s32.totalorder %v680, 0
  %vm773 = vcmp.lt.s32.totalorder %v691, 0
  %vm774 = vcmp.lt.s32.totalorder %v702, 0
  %vm775 = vcmp.lt.s32.totalorder %v713, 0
  %vm776 = vcmp.lt.s32.totalorder %v724, 0
  %vm777 = vcmp.lt.s32.totalorder %v735, 0
  %vm778 = vcmp.lt.s32.totalorder %v746, 0
  %vm779 = vmand %vm763, %vm747
  %vm780 = vmand %vm764, %vm748
  %vm781 = vmand %vm765, %vm749
  %vm782 = vmand %vm766, %vm750
  %vm783 = vmand %vm767, %vm751
  %vm784 = vmand %vm768, %vm752
  %vm785 = vmand %vm769, %vm753
  %vm786 = vmand %vm770, %vm754
  %vm787 = vmand %vm771, %vm755
  %vm788 = vmand %vm772, %vm756
  %vm789 = vmand %vm773, %vm757
  %vm790 = vmand %vm774, %vm758
  %vm791 = vmand %vm775, %vm759
  %vm792 = vmand %vm776, %vm760
  %vm793 = vmand %vm777, %vm761
  %vm794 = vmand %vm778, %vm762
  %v795 = vadd.s32 %v581, 3
  %v796 = vadd.s32 %v592, 3
  %v797 = vadd.s32 %v603, 3
  %v798 = vadd.s32 %v614, 3
  %v799 = vadd.s32 %v625, 3
  %v800 = vadd.s32 %v636, 3
  %v801 = vadd.s32 %v647, 3
  %v802 = vadd.s32 %v658, 3
  %v803 = vadd.s32 %v669, 3
  %v804 = vadd.s32 %v680, 3
  %v805 = vadd.s32 %v691, 3
  %v806 = vadd.s32 %v702, 3
  %v807 = vadd.s32 %v713, 3
  %v808 = vadd.s32 %v724, 3
  %v809 = vadd.s32 %v735, 3
  %v810 = vadd.s32 %v746, 3
  %v811 = vsel %vm779, %v795, %v581
  %v812 = vsel %vm780, %v796, %v592
  %v813 = vsel %vm781, %v797, %v603
  %v814 = vsel %vm782, %v798, %v614
  %v815 = vsel %vm783, %v799, %v625
  %v816 = vsel %vm784, %v800, %v636
  %v817 = vsel %vm785, %v801, %v647
  %v818 = vsel %vm786, %v802, %v658
  %v819 = vsel %vm787, %v803, %v669
  %v820 = vsel %vm788, %v804, %v680
  %v821 = vsel %vm789, %v805, %v691
  %v822 = vsel %vm790, %v806, %v702
  %v823 = vsel %vm791, %v807, %v713
  %v824 = vsel %vm792, %v808, %v724
  %v825 = vsel %vm793, %v809, %v735
  %v826 = vsel %vm794, %v810, %v746
  %v827 = vsub.s32 %v400, 10
  %vm828 = vcmp.eq.s32.totalorder %v811, %v827
  %vm829 = vcmp.eq.s32.totalorder %v812, %v827
  %vm830 = vcmp.eq.s32.totalorder %v813, %v827
  %vm831 = vcmp.eq.s32.totalorder %v814, %v827
  %vm832 = vcmp.eq.s32.totalorder %v815, %v827
  %vm833 = vcmp.eq.s32.totalorder %v816, %v827
  %vm834 = vcmp.eq.s32.totalorder %v817, %v827
  %vm835 = vcmp.eq.s32.totalorder %v818, %v827
  %vm836 = vcmp.eq.s32.totalorder %v819, %v827
  %vm837 = vcmp.eq.s32.totalorder %v820, %v827
  %vm838 = vcmp.eq.s32.totalorder %v821, %v827
  %vm839 = vcmp.eq.s32.totalorder %v822, %v827
  %vm840 = vcmp.eq.s32.totalorder %v823, %v827
  %vm841 = vcmp.eq.s32.totalorder %v824, %v827
  %vm842 = vcmp.eq.s32.totalorder %v825, %v827
  %vm843 = vcmp.eq.s32.totalorder %v826, %v827
  %vm844 = vmand %vm539, %vm828
  %vm845 = vmand %vm540, %vm829
  %vm846 = vmand %vm541, %vm830
  %vm847 = vmand %vm542, %vm831
  %vm848 = vmand %vm543, %vm832
  %vm849 = vmand %vm544, %vm833
  %vm850 = vmand %vm545, %vm834
  %vm851 = vmand %vm546, %vm835
  %vm852 = vmand %vm547, %vm836
  %vm853 = vmand %vm548, %vm837
  %vm854 = vmand %vm549, %vm838
  %vm855 = vmand %vm550, %vm839
  %vm856 = vmand %vm551, %vm840
  %vm857 = vmand %vm552, %vm841
  %vm858 = vmand %vm553, %vm842
  %vm859 = vmand %vm554, %vm843
  %v860 = vsel %vm844, 1, 0
  %v861 = vsel %vm845, 1, 0
  %v862 = vsel %vm846, 1, 0
  %v863 = vsel %vm847, 1, 0
  %v864 = vsel %vm848, 1, 0
  %v865 = vsel %vm849, 1, 0
  %v866 = vsel %vm850, 1, 0
  %v867 = vsel %vm851, 1, 0
  %v868 = vsel %vm852, 1, 0
  %v869 = vsel %vm853, 1, 0
  %v870 = vsel %vm854, 1, 0
  %v871 = vsel %vm855, 1, 0
  %v872 = vsel %vm856, 1, 0
  %v873 = vsel %vm857, 1, 0
  %v874 = vsel %vm858, 1, 0
  %v875 = vsel %vm859, 1, 0
  %v876 = vcvt.s32.f32 %v860
  %v877 = vcvt.s32.f32 %v861
  %v878 = vcvt.s32.f32 %v862
  %v879 = vcvt.s32.f32 %v863
  %v880 = vcvt.s32.f32 %v864
  %v881 = vcvt.s32.f32 %v865
  %v882 = vcvt.s32.f32 %v866
  %v883 = vcvt.s32.f32 %v867
  %v884 = vcvt.s32.f32 %v868
  %v885 = vcvt.s32.f32 %v869
  %v886 = vcvt.s32.f32 %v870
  %v887 = vcvt.s32.f32 %v871
  %v888 = vcvt.s32.f32 %v872
  %v889 = vcvt.s32.f32 %v873
  %v890 = vcvt.s32.f32 %v874
  %v891 = vcvt.s32.f32 %v875
  %892 = vmatprep.subr.mxu0 0.0
  %893 = vmatpush1.msra.mxu0 %v876
  %894 = vmatprep.subr.mxu0 0.0
  %895 = vmatpush1.msra.mxu0 %v877
  %896 = vmatprep.subr.mxu0 0.0
  %897 = vmatpush1.msra.mxu0 %v878
  %898 = vmatprep.subr.mxu0 0.0
  %899 = vmatpush1.msra.mxu0 %v879
  %900 = vmatprep.subr.mxu0 0.0
  %901 = vmatpush1.msra.mxu0 %v880
  %902 = vmatprep.subr.mxu0 0.0
  %903 = vmatpush1.msra.mxu0 %v881
  %904 = vmatprep.subr.mxu0 0.0
  %905 = vmatpush1.msra.mxu0 %v882
  %906 = vmatprep.subr.mxu0 0.0
  %907 = vmatpush1.msra.mxu0 %v883
  %908 = vmatprep.subr.mxu0 0.0
  %909 = vmatpush1.msra.mxu0 %v884
  %910 = vmatprep.subr.mxu0 0.0
  %911 = vmatpush1.msra.mxu0 %v885
  %912 = vmatprep.subr.mxu0 0.0
  %913 = vmatpush1.msra.mxu0 %v886
  %914 = vmatprep.subr.mxu0 0.0
  %915 = vmatpush1.msra.mxu0 %v887
  %916 = vmatprep.subr.mxu0 0.0
  %917 = vmatpush1.msra.mxu0 %v888
  %918 = vmatprep.subr.mxu0 0.0
  %919 = vmatpush1.msra.mxu0 %v889
  %920 = vmatprep.subr.mxu0 0.0
  %921 = vmatpush1.msra.mxu0 %v890
  %922 = vmatprep.subr.mxu0 0.0
  %923 = vmatpush1.msra.mxu0 %v891
  %924 = vmatprep.subr.mxu0 0.0
  %925 = vmatpush1.msra.mxu0 0.0
  %926 = vmatprep.subr.mxu0 0.0
  %927 = vmatpush1.msra.mxu0 0.0
  %928 = vmatprep.subr.mxu0 0.0
  %929 = vmatpush1.msra.mxu0 0.0
  %930 = vmatprep.subr.mxu0 0.0
  %931 = vmatpush1.msra.mxu0 0.0
  %932 = vmatprep.subr.mxu0 0.0
  %933 = vmatpush1.msra.mxu0 0.0
  %934 = vmatprep.subr.mxu0 0.0
  %935 = vmatpush1.msra.mxu0 0.0
  %936 = vmatprep.subr.mxu0 0.0
  %937 = vmatpush1.msra.mxu0 0.0
  %938 = vmatprep.subr.mxu0 0.0
  %939 = vmatpush1.msra.mxu0 0.0
  %940 = vmatprep.subr.mxu0 0.0
  %941 = vmatpush1.msra.mxu0 0.0
  %942 = vmatprep.subr.mxu0 0.0
  %943 = vmatpush1.msra.mxu0 0.0
  %944 = vmatprep.subr.mxu0 0.0
  %945 = vmatpush1.msra.mxu0 0.0
  %946 = vmatprep.subr.mxu0 0.0
  %947 = vmatpush1.msra.mxu0 0.0
  %948 = vmatprep.subr.mxu0 0.0
  %949 = vmatpush1.msra.mxu0 0.0
  %950 = vmatprep.subr.mxu0 0.0
  %951 = vmatpush1.msra.mxu0 0.0
  %952 = vmatprep.subr.mxu0 0.0
  %953 = vmatpush1.msra.mxu0 0.0
  %954 = vmatprep.subr.mxu0 0.0
  %955 = vmatpush1.msra.mxu0 0.0
  %956 = vmatprep.mubr.f32.mxu0 0.0
  %957 = vmatmul.mubr.f32.gmra.mrb[0].mxu0 %v454
  %v958 = vpop.f32.mrb[0].mxu0
  %v959 = vadd.f32 0.0, %v958
  %v960 = vpop.f32.mrb[0].mxu0
  %961 = vmatprep.mubr.f32.mxu0 0.0
  %962 = vmatmul.mubr.f32.gmra.mrb[0].mxu0 %v455
  %v963 = vpop.f32.mrb[0].mxu0
  %v964 = vadd.f32 0.0, %v963
  %v965 = vpop.f32.mrb[0].mxu0
  %966 = vdwg.mxu0
  %v967 = vtanh.pop %v959
  %v968 = vtanh.pop %v964
  %v969 = vmul.f32 %v967, 3.1415927
  %v970 = vmul.f32 %v968, 3.1415927
  %v971 = vsel %vm401, %v393, %v969
  %v972 = vsel %vm401, %v396, %v970
  %973 = vst [vmem:[%s4] sm:$0xff] %v971
  %974 = vst [vmem:[%s4 + $0x8] sm:$0xff] %v972
  // Predicated region
  $region18: #{joint_cat_pose_forward.1} parent=0 // pred_check
    _
  $region19: #{joint_cat_pose_forward.1} parent=0 // pred_check_branch
    %976 = sbr.rel (0) target = $region21
  $region20: #{joint_cat_pose_forward.1} parent=0 // pred_region
    _
  $region21: #{joint_cat_pose_forward.1} parent=0 // pred_fallthru
    _
  // Predicated region
  $region22: #{joint_cat_pose_forward.1} parent=0 // pred_check
    _
  $region23: #{joint_cat_pose_forward.1} parent=0 // pred_check_branch
    %978 = sbr.rel (0) target = $region25
  $region24: #{joint_cat_pose_forward.1} parent=0 // pred_region
    _
  $region25: #{joint_cat_pose_forward.1} parent=0 // pred_fallthru
    _

</llo_original>
